<compile_context>
chip_gen: v5e
topology: v5e:2x2
jax: 0.10.0
libtpu: 0.0.40
codegen_flags: <defaults>
</compile_context>

<pallas_src>
import functools

import jax
import jax.numpy as jnp
import numpy as np
from jax.experimental import pallas as pl
from jax.experimental.pallas import tpu as pltpu  # noqa: F401  (kept for TPU-specific params if needed)


def _round_up(n, m):
    return ((n + m - 1) // m) * m


def _gru_kernel(xh_ref, h_ref, wbig_ref, wh_ref, b_ref, out_ref, *, hp):
    """Fused GRU cell.

    xh_ref  : [B, I+H]    bf16   concat(x, h)
    h_ref   : [B, Hp]     f32    zero-padded hidden state
    wbig_ref: [I+H, 3*Hp] bf16   [W_u | W_r | W_cand_x (h-rows zeroed)], zero-padded cols
    wh_ref  : [Hp, Hp]    bf16   h-rows of W_cand, zero-padded
    b_ref   : [1, 3*Hp]   f32    [b_u | b_r | b], zero-padded cols
    out_ref : [B, Hp]     f32    new hidden state (padded)
    """
    xh = xh_ref[...]                         # [B, I+H] bf16
    h = h_ref[...]                           # [B, Hp]  f32

    # One wide MXU matmul for both gates + the x-part of the candidate (N = 3*Hp lanes).
    gates = jnp.dot(xh, wbig_ref[...], preferred_element_type=jnp.float32) + b_ref[...]

    z = jax.nn.sigmoid(gates[:, :hp])                # update gate   [B, Hp]
    r = jax.nn.sigmoid(gates[:, hp:2 * hp])          # reset gate    [B, Hp]
    cx = gates[:, 2 * hp:]                           # x @ W_x + b   [B, Hp]

    # Second (and last) matmul: (r*h) @ W_h.
    rh = (r * h).astype(wh_ref.dtype)                # bf16 for the MXU
    c = jnp.tanh(cx + jnp.dot(rh, wh_ref[...], preferred_element_type=jnp.float32))

    out_ref[...] = z * h + (1.0 - z) * c


def gru_cell_pallas(x, hidden_state, params):
    """x: [B, I], hidden_state: [B, H] -> new hidden state [B, H] (float32)."""
    B, I = x.shape
    H = hidden_state.shape[1]
    K = I + H
    Hp = _round_up(max(H, 128), 128)         # lane-dense output / matmul N

    wu, bu = params["weight_u"], params["bias_u"]
    wr, br = params["weight_r"], params["bias_r"]
    w, b = params["weight"], params["bias"]

    pad_cols = lambda m: jnp.pad(m, ((0, 0), (0, Hp - H)))

    # Candidate weight split: x-rows go into the fused matmul, h-rows into the second one.
    w_cand_x = jnp.concatenate([w[:I, :], jnp.zeros((H, H), w.dtype)], axis=0)   # [K, H]
    w_big = jnp.concatenate(
        [pad_cols(wu), pad_cols(wr), pad_cols(w_cand_x)], axis=1
    ).astype(jnp.bfloat16)                                                       # [K, 3*Hp]
    w_h = jnp.pad(w[I:, :], ((0, Hp - H), (0, Hp - H))).astype(jnp.bfloat16)     # [Hp, Hp]
    b_fused = jnp.concatenate(
        [pad_cols(bu), pad_cols(br), pad_cols(b)], axis=1
    ).astype(jnp.float32)                                                        # [1, 3*Hp]

    xh = jnp.concatenate([x, hidden_state], axis=1).astype(jnp.bfloat16)         # [B, K]
    h_pad = jnp.pad(hidden_state, ((0, 0), (0, Hp - H))).astype(jnp.float32)     # [B, Hp]

    full = lambda shp: pl.BlockSpec(shp, lambda: (0, 0))
    out_pad = pl.pallas_call(
        functools.partial(_gru_kernel, hp=Hp),
        out_shape=jax.ShapeDtypeStruct((B, Hp), jnp.float32),
        in_specs=[
            full((B, K)),          # xh (bf16)
            full((B, Hp)),         # h padded (f32)
            full((K, 3 * Hp)),     # fused weights (bf16)
            full((Hp, Hp)),        # candidate h-weights (bf16)
            full((1, 3 * Hp)),     # fused biases (f32)
        ],
        out_specs=full((B, Hp)),
    )(xh, h_pad, w_big, w_h, b_fused)

    return out_pad[:, :H]


def gru_cell_reference(x, hidden_state, params):
    """Pure-JAX f32 reference matching the PyTorch GRUCell semantics."""
    wu, bu = params["weight_u"], params["bias_u"]
    wr, br = params["weight_r"], params["bias_r"]
    w, b = params["weight"], params["bias"]
    xh = jnp.concatenate([x, hidden_state], axis=1)
    z = jax.nn.sigmoid(xh @ wu + bu)
    r = jax.nn.sigmoid(xh @ wr + br)
    xrh = jnp.concatenate([x, r * hidden_state], axis=1)
    c = jnp.tanh(xrh @ w + b)
    return z * hidden_state + (1.0 - z) * c


def init_params(key, input_size, hidden_size):
    """Deterministic synthetic parameters matching the module's shapes:
       weight_{u,r,}: [input_size + hidden, hidden], bias_{u,r,}: [1, hidden]."""
    ks = jax.random.split(key, 6)
    scale = 1.0 / np.sqrt(input_size + hidden_size)
    shp_w = (input_size + hidden_size, hidden_size)
    return {
        "weight_u": jax.random.normal(ks[0], shp_w, jnp.float32) * scale,
        "bias_u": jax.random.normal(ks[3], (1, hidden_size), jnp.float32) * 0.1,
        "weight_r": jax.random.normal(ks[1], shp_w, jnp.float32) * scale,
        "bias_r": jax.random.normal(ks[4], (1, hidden_size), jnp.float32) * 0.1,
        "weight": jax.random.normal(ks[2], shp_w, jnp.float32) * scale,
        "bias": jax.random.normal(ks[5], (1, hidden_size), jnp.float32) * 0.1,
    }


if __name__ == "__main__":
    key = jax.random.PRNGKey(0)
    k_x, k_h, k_p = jax.random.split(key, 3)

    batch = 8
    input_size = 32
    hidden_size = 32

    x = jax.random.normal(k_x, (batch, input_size), jnp.float32)
    h0 = jax.random.normal(k_h, (batch, hidden_size), jnp.float32)
    params = init_params(k_p, input_size, hidden_size)

    h_new = gru_cell_pallas(x, h0, params)
    h_new = jax.block_until_ready(h_new)

    h_ref = gru_cell_reference(x, h0, params)
    assert h_new.shape == (batch, hidden_size)
    # Matmul inputs are bf16 (f32 accumulation), so tolerance is loosened vs pure-f32.
    assert np.allclose(np.asarray(h_new), np.asarray(h_ref), atol=2.5e-2, rtol=2.5e-2), (
        float(np.max(np.abs(np.asarray(h_new) - np.asarray(h_ref))))
    )

    print("KERNEL_OK")
</pallas_src>

<mosaic_0001>
module attributes {stable_mosaic.version = 11 : i64} {
  func.func @_gru_kernel(%arg0: memref<8x64xbf16, #tpu.memory_space<vmem>>, %arg1: memref<8x128xf32, #tpu.memory_space<vmem>>, %arg2: memref<64x384xbf16, #tpu.memory_space<vmem>>, %arg3: memref<128x128xbf16, #tpu.memory_space<vmem>>, %arg4: memref<1x384xf32, #tpu.memory_space<vmem>>, %arg5: memref<8x128xf32, #tpu.memory_space<vmem>>) attributes {dimension_semantics = [], scalar_prefetch = 0 : i64, scratch_operands = 0 : i64, tpu.core_type = #tpu.core_type<tc>} {
    %c0 = arith.constant 0 : index
    %c0_0 = arith.constant 0 : index
    %0 = vector.load %arg0[%c0, %c0_0] : memref<8x64xbf16, #tpu.memory_space<vmem>>, vector<8x64xbf16>
    %c0_1 = arith.constant 0 : index
    %c0_2 = arith.constant 0 : index
    %1 = vector.load %arg1[%c0_1, %c0_2] : memref<8x128xf32, #tpu.memory_space<vmem>>, vector<8x128xf32>
    %c0_3 = arith.constant 0 : index
    %c0_4 = arith.constant 0 : index
    %2 = vector.load %arg2[%c0_3, %c0_4] : memref<64x384xbf16, #tpu.memory_space<vmem>>, vector<64x384xbf16>
    %cst = arith.constant dense<0.000000e+00> : vector<8x384xf32>
    %3 = tpu.matmul %0, %2, %cst {dimension_numbers = #tpu.dot_dimension_numbers<[1], [0], [0], [1], [0, 0, 1, 1], [], []>} : vector<8x64xbf16>, vector<64x384xbf16>, vector<8x384xf32> -> vector<8x384xf32>
    %c0_5 = arith.constant 0 : index
    %c0_6 = arith.constant 0 : index
    %4 = vector.load %arg4[%c0_5, %c0_6] : memref<1x384xf32, #tpu.memory_space<vmem>>, vector<1x384xf32>
    %5 = vector.broadcast %4 : vector<1x384xf32> to vector<8x384xf32>
    %6 = arith.addf %3, %5 : vector<8x384xf32>
    %7 = vector.extract_strided_slice %6 {offsets = [0, 0], sizes = [8, 128], strides = [1, 1]} : vector<8x384xf32> to vector<8x128xf32>
    %8 = arith.negf %7 : vector<8x128xf32>
    %9 = math.exp %8 : vector<8x128xf32>
    %cst_7 = arith.constant 1.000000e+00 : f32
    %10 = vector.broadcast %cst_7 : f32 to vector<8x128xf32>
    %11 = arith.addf %10, %9 : vector<8x128xf32>
    %12 = arith.divf %10, %11 : vector<8x128xf32>
    %13 = vector.extract_strided_slice %6 {offsets = [0, 128], sizes = [8, 128], strides = [1, 1]} : vector<8x384xf32> to vector<8x128xf32>
    %14 = arith.negf %13 : vector<8x128xf32>
    %15 = math.exp %14 : vector<8x128xf32>
    %cst_8 = arith.constant 1.000000e+00 : f32
    %16 = vector.broadcast %cst_8 : f32 to vector<8x128xf32>
    %17 = arith.addf %16, %15 : vector<8x128xf32>
    %18 = arith.divf %16, %17 : vector<8x128xf32>
    %19 = vector.extract_strided_slice %6 {offsets = [0, 256], sizes = [8, 128], strides = [1, 1]} : vector<8x384xf32> to vector<8x128xf32>
    %20 = arith.mulf %18, %1 : vector<8x128xf32>
    %21 = arith.truncf %20 : vector<8x128xf32> to vector<8x128xbf16>
    %c0_9 = arith.constant 0 : index
    %c0_10 = arith.constant 0 : index
    %22 = vector.load %arg3[%c0_9, %c0_10] : memref<128x128xbf16, #tpu.memory_space<vmem>>, vector<128x128xbf16>
    %cst_11 = arith.constant dense<0.000000e+00> : vector<8x128xf32>
    %23 = tpu.matmul %21, %22, %cst_11 {dimension_numbers = #tpu.dot_dimension_numbers<[1], [0], [0], [1], [0, 0, 1, 1], [], []>} : vector<8x128xbf16>, vector<128x128xbf16>, vector<8x128xf32> -> vector<8x128xf32>
    %24 = arith.addf %19, %23 : vector<8x128xf32>
    %25 = math.tanh %24 : vector<8x128xf32>
    %26 = arith.mulf %12, %1 : vector<8x128xf32>
    %cst_12 = arith.constant 1.000000e+00 : f32
    %27 = vector.broadcast %cst_12 : f32 to vector<8x128xf32>
    %28 = arith.subf %27, %12 : vector<8x128xf32>
    %29 = arith.mulf %28, %25 : vector<8x128xf32>
    %30 = arith.addf %26, %29 : vector<8x128xf32>
    %c0_13 = arith.constant 0 : index
    %c0_14 = arith.constant 0 : index
    %31 = vector.load %arg5[%c0_13, %c0_14] : memref<8x128xf32, #tpu.memory_space<vmem>>, vector<8x128xf32>
    tpu.vector_store %arg5[%c0_13, %c0_14], %30 {strides = array<i32>} : memref<8x128xf32, #tpu.memory_space<vmem>>, vector<8x128xf32>,
    return
  }
}

</mosaic_0001>

<llo_original>
// kernel: tpu_custom_call.1
$region0: #{tpu_custom_call.1}
  #allocation0 [shape = 'u32[]', space=smem, size = 0x4, offset = 0x4, fixed_abs, tag = 'smem constant byte address 0x4 - core index']
  #allocation1 [shape = 'u32[72,128]{1,0:T(1,128)}', space=vmem, size = 0x9000, scoped, tag = 'internal scratch']
  %s0 = inlined_call_operand.hbm [shape: bf16[8,64], index: 0, kind: input, shape index: {}]
  %s1 = inlined_call_operand.hbm [shape: f32[8,128], index: 1, kind: input, shape index: {}]
  %s2 = inlined_call_operand.hbm [shape: bf16[64,384], index: 2, kind: input, shape index: {}]
  %s3 = inlined_call_operand.hbm [shape: bf16[128,128], index: 3, kind: input, shape index: {}]
  %s4 = inlined_call_operand.vmem [shape: f32[1,384], index: 4, kind: input, shape index: {}]
  %s5 = inlined_call_operand.hbm [shape: f32[8,128], index: 5, kind: output, shape index: {}]
  %s6 = sld [smem:[#allocation0]]
  $region46: #{tpu_custom_call.1} parent=0
    _
  %s8 = ssub.s32 1, %s6
  %s9 = scalar_select 0, %s8, %s6
  $region1: #{tpu_custom_call.1} parent=0
    #allocation2 [shape = 'u8[2048]{0}', space=vmem, size = 0x800, scoped, tag = 'input window, operand 0, single buffered']
    #allocation3 [shape = 's32[1]{0}', space=sflag, size = 0x4, scoped, tag = 'scoped memory for tpu_custom_call.1']
    #allocation4 [shape = 's32[1]{0}', space=sflag, size = 0x4, scoped, tag = 'scoped memory for tpu_custom_call.1']
    #allocation5 [shape = 'u8[4096]{0}', space=vmem, size = 0x1000, scoped, tag = 'input window, operand 1, single buffered']
    #allocation6 [shape = 's32[1]{0}', space=sflag, size = 0x4, scoped, tag = 'scoped memory for tpu_custom_call.1']
    #allocation7 [shape = 'u8[49152]{0}', space=vmem, size = 0xc000, scoped, tag = 'input window, operand 2, single buffered']
    #allocation8 [shape = 'u8[32768]{0}', space=vmem, size = 0x8000, scoped, tag = 'input window, operand 3, single buffered']
    #allocation9 [shape = 's32[1]{0}', space=sflag, size = 0x4, scoped, tag = 'scoped memory for tpu_custom_call.1']
    #allocation10 [shape = 'u8[4096]{0}', space=vmem, size = 0x1000, scoped, tag = 'output window, operand 0, single buffered']
    %10 = vsyncpa [#allocation3], 0
    %11 = vsyncpa [#allocation6], 0
    %12 = vsyncpa [#allocation9], 0
    %13 = vsyncpa [#allocation4], 0
    // Predicated region
    $region2: #{tpu_custom_call.1} parent=1 // pred_check
      _
    $region3: #{tpu_custom_call.1} parent=1 // pred_check_branch
      %15 = sbr.rel (0) target = $region5
    $region4: #{tpu_custom_call.1} parent=1 // pred_region
      %17 = vsyncadd [#allocation3], 0
      %s19 = sshll.u32 %s0, 4
      %s20 = int_to_ptr.hbm [resolvable:$true] %s19
      %s21 = sshll.u32 [#allocation2], 4
      %s22 = int_to_ptr.vmem [resolvable:$true] %s21
      %24 = dma.hbm_to_vmem [thread:$0]  %s20, 64, %s22, [#allocation3]
    $region5: #{tpu_custom_call.1} parent=1 // pred_fallthru
      _
    // Predicated region
    $region6: #{tpu_custom_call.1} parent=1 // pred_check
      _
    $region7: #{tpu_custom_call.1} parent=1 // pred_check_branch
      %26 = sbr.rel (0) target = $region9
    $region8: #{tpu_custom_call.1} parent=1 // pred_region
      %28 = vsyncadd [#allocation6], 0
      %s30 = sshll.u32 %s1, 4
      %s31 = int_to_ptr.hbm [resolvable:$true] %s30
      %s32 = sshll.u32 [#allocation5], 4
      %s33 = int_to_ptr.vmem [resolvable:$true] %s32
      %35 = dma.hbm_to_vmem [thread:$0]  %s31, 128, %s33, [#allocation6]
    $region9: #{tpu_custom_call.1} parent=1 // pred_fallthru
      _
    // Predicated region
    $region10: #{tpu_custom_call.1} parent=1 // pred_check
      _
    $region11: #{tpu_custom_call.1} parent=1 // pred_check_branch
      %37 = sbr.rel (0) target = $region13
    $region12: #{tpu_custom_call.1} parent=1 // pred_region
      %39 = vsyncadd [#allocation6], 0
      %s40 = sshll.u32 %s2, 4
      %s41 = int_to_ptr.hbm [resolvable:$true] %s40
      %s42 = sshll.u32 [#allocation7], 4
      %s43 = int_to_ptr.vmem [resolvable:$true] %s42
      %48 = dma.hbm_to_vmem [thread:$0]  %s41, 1536, %s43, [#allocation6], 192, 192, 12
    $region13: #{tpu_custom_call.1} parent=1 // pred_fallthru
      _
    // Predicated region
    $region14: #{tpu_custom_call.1} parent=1 // pred_check
      _
    $region15: #{tpu_custom_call.1} parent=1 // pred_check_branch
      %50 = sbr.rel (0) target = $region17
    $region16: #{tpu_custom_call.1} parent=1 // pred_region
      %52 = vsyncadd [#allocation9], 0
      %s53 = sshll.u32 %s3, 4
      %s54 = int_to_ptr.hbm [resolvable:$true] %s53
      %s55 = sshll.u32 [#allocation8], 4
      %s56 = int_to_ptr.vmem [resolvable:$true] %s55
      %61 = dma.hbm_to_vmem [thread:$0]  %s54, 1024, %s56, [#allocation9], 64, 64, 4
    $region17: #{tpu_custom_call.1} parent=1 // pred_fallthru
      _
    // Predicated region
    $region18: #{tpu_custom_call.1} parent=1 // pred_check
      _
    $region19: #{tpu_custom_call.1} parent=1 // pred_check_branch
      %63 = sbr.rel (0) target = $region21
    $region20: #{tpu_custom_call.1} parent=1 // pred_region
      _
    $region21: #{tpu_custom_call.1} parent=1 // pred_fallthru
      _
    // Predicated region
    $region22: #{tpu_custom_call.1} parent=1 // pred_check
      _
    $region23: #{tpu_custom_call.1} parent=1 // pred_check_branch
      %65 = sbr.rel (0) target = $region25
    $region24: #{tpu_custom_call.1} parent=1 // pred_region
      %67 = dma.done [#allocation3], 64
    $region25: #{tpu_custom_call.1} parent=1 // pred_fallthru
      _
    // Predicated region
    $region26: #{tpu_custom_call.1} parent=1 // pred_check
      _
    $region27: #{tpu_custom_call.1} parent=1 // pred_check_branch
      %69 = sbr.rel (0) target = $region29
    $region28: #{tpu_custom_call.1} parent=1 // pred_region
      %71 = dma.done [#allocation6], 128
    $region29: #{tpu_custom_call.1} parent=1 // pred_fallthru
      _
    // Predicated region
    $region30: #{tpu_custom_call.1} parent=1 // pred_check
      _
    $region31: #{tpu_custom_call.1} parent=1 // pred_check_branch
      %73 = sbr.rel (0) target = $region33
    $region32: #{tpu_custom_call.1} parent=1 // pred_region
      %75 = dma.done [#allocation6], 1536
    $region33: #{tpu_custom_call.1} parent=1 // pred_fallthru
      _
    // Predicated region
    $region34: #{tpu_custom_call.1} parent=1 // pred_check
      _
    $region35: #{tpu_custom_call.1} parent=1 // pred_check_branch
      %77 = sbr.rel (0) target = $region37
    $region36: #{tpu_custom_call.1} parent=1 // pred_region
      %79 = dma.done [#allocation9], 1024
    $region37: #{tpu_custom_call.1} parent=1 // pred_fallthru
      _
    %v81 = vld [vmem:[#allocation2] sm:$0xf]
    %v82 = vld [vmem:[#allocation5] sm:$0xff]
    %v83 = vld [vmem:[#allocation7] sm:$0xff]
    %v84 = vld [vmem:[#allocation7 + $0x8] sm:$0xf]
    %v85 = vld [vmem:[#allocation7 + $0xc] sm:$0xff]
    %v86 = vld [vmem:[#allocation7 + $0x14] sm:$0xf]
    %v87 = vld [vmem:[#allocation7 + $0x18] sm:$0xff]
    %v88 = vld [vmem:[#allocation7 + $0x20] sm:$0xf]
    %v89 = vld [vmem:[#allocation7 + $0x24] sm:$0xff]
    %v90 = vld [vmem:[#allocation7 + $0x2c] sm:$0xf]
    %v91 = vld [vmem:[#allocation7 + $0x30] sm:$0xff]
    %v92 = vld [vmem:[#allocation7 + $0x38] sm:$0xf]
    %v93 = vld [vmem:[#allocation7 + $0x3c] sm:$0xff]
    %v94 = vld [vmem:[#allocation7 + $0x44] sm:$0xf]
    %v95 = vld [vmem:[#allocation7 + $0x48] sm:$0xff]
    %v96 = vld [vmem:[#allocation7 + $0x50] sm:$0xf]
    %v97 = vld [vmem:[#allocation7 + $0x54] sm:$0xff]
    %v98 = vld [vmem:[#allocation7 + $0x5c] sm:$0xf]
    %v99 = vld [vmem:[%s4] sm:$0x7]
    %v101 = vperm.slane %v99, 0
    %v102 = vperm.slane %v99, 1
    %v103 = vperm.slane %v99, 2
    %v123 = vunpack.c.l.b16 %v83
    %v124 = vunpack.c.h.b16 %v83
    %v125 = vunpack.c.l.b16 %v84
    %v126 = vunpack.c.l.b16 %v85
    %v127 = vunpack.c.h.b16 %v85
    %v128 = vunpack.c.l.b16 %v86
    %v129 = vunpack.c.l.b16 %v87
    %v130 = vunpack.c.h.b16 %v87
    %v131 = vunpack.c.l.b16 %v88
    %v132 = vunpack.c.l.b16 %v89
    %v133 = vunpack.c.h.b16 %v89
    %v134 = vunpack.c.l.b16 %v90
    %v135 = vunpack.c.l.b16 %v91
    %v136 = vunpack.c.h.b16 %v91
    %v137 = vunpack.c.l.b16 %v92
    %v138 = vunpack.c.l.b16 %v93
    %v139 = vunpack.c.h.b16 %v93
    %v140 = vunpack.c.l.b16 %v94
    %v141 = vunpack.c.l.b16 %v95
    %v142 = vunpack.c.h.b16 %v95
    %v143 = vunpack.c.l.b16 %v96
    %v144 = vunpack.c.l.b16 %v97
    %v145 = vunpack.c.h.b16 %v97
    %v146 = vunpack.c.l.b16 %v98
    %v147 = vpack.c.b16 %v126, %v123
    %v148 = vpack.c.b16 %v127, %v124
    %v149 = vpack.c.b16 %v128, %v125
    %v150 = vpack.c.b16 %v132, %v129
    %v151 = vpack.c.b16 %v133, %v130
    %v152 = vpack.c.b16 %v134, %v131
    %v153 = vpack.c.b16 %v138, %v135
    %v154 = vpack.c.b16 %v139, %v136
    %v155 = vpack.c.b16 %v140, %v137
    %v156 = vpack.c.b16 %v144, %v141
    %v157 = vpack.c.b16 %v145, %v142
    %v158 = vpack.c.b16 %v146, %v143
    %vm171 = vcmask 523264
    %v173 = vsel %vm171, %v81, 0
    %175 = vmatpush.bf16.msra.mxu0 0
    %176 = vmatpush.bf16.msra.mxu0 0
    %177 = vmatpush.bf16.msra.mxu0 0
    %178 = vmatpush.bf16.msra.mxu0 0
    %179 = vmatpush.bf16.msra.mxu0 %v156
    %180 = vmatpush.bf16.msra.mxu0 %v153
    %181 = vmatpush.bf16.msra.mxu0 %v150
    %182 = vmatpush.bf16.msra.mxu0 %v147
    %183 = vmatmul.bf16.gmra.mxu0 %v173
    %v184 = vpop.f32.mrf.mxu0
    %v185 = vadd.f32 %v101, %v184
    %v186 = vpop.f32.mrf.mxu0
    %187 = vdwg.mxu0
    %188 = vmatpush.bf16.msra.mxu0 0
    %189 = vmatpush.bf16.msra.mxu0 0
    %190 = vmatpush.bf16.msra.mxu0 0
    %191 = vmatpush.bf16.msra.mxu0 0
    %192 = vmatpush.bf16.msra.mxu0 %v157
    %193 = vmatpush.bf16.msra.mxu0 %v154
    %194 = vmatpush.bf16.msra.mxu0 %v151
    %195 = vmatpush.bf16.msra.mxu0 %v148
    %196 = vmatmul.bf16.gmra.mxu0 %v173
    %v197 = vpop.f32.mrf.mxu0
    %v198 = vadd.f32 %v102, %v197
    %v199 = vpop.f32.mrf.mxu0
    %200 = vdwg.mxu0
    %201 = vmatpush.bf16.msra.mxu0 0
    %202 = vmatpush.bf16.msra.mxu0 0
    %203 = vmatpush.bf16.msra.mxu0 0
    %204 = vmatpush.bf16.msra.mxu0 0
    %205 = vmatpush.bf16.msra.mxu0 %v158
    %206 = vmatpush.bf16.msra.mxu0 %v155
    %207 = vmatpush.bf16.msra.mxu0 %v152
    %208 = vmatpush.bf16.msra.mxu0 %v149
    %209 = vmatmul.bf16.gmra.mxu0 %v173
    %v210 = vpop.f32.mrf.mxu0
    %v211 = vadd.f32 %v103, %v210
    %v212 = vpop.f32.mrf.mxu0
    %213 = vdwg.mxu0
    %v214 = vxor.u32 %v185, 2147483648
    %v215 = vmul.f32 %v214, 1.442695
    %v216 = vpow.pop %v215
    %v217 = vadd.f32 %v216, 1.0
    %v218 = vrcp.pop %v217
    %v219 = vmul.f32 %v217, %v218
    %v220 = vsub.f32 1.0, %v219
    %v221 = vmul.f32 %v218, %v220
    %v222 = vadd.f32 %v218, %v221
    %vm223 = vweird.f32 %v217
    %vm224 = vweird.f32 %v218
    %vm225 = vmor %vm223, %vm224
    %v226 = vsel %vm225, %v218, %v222
    %v227 = vand.u32 2147483647, %v217
    %vm228 = vcmp.eq.f32.partialorder %v227, 8.507059e+37
    %v229 = vand.u32 %v217, 2147483648
    %v230 = vor.u32 1.1754944e-38, %v229
    %v231 = vsel %vm228, %v230, %v226
    %v232 = vmul.f32 1.0, %v231
    %v233 = vxor.u32 %v198, 2147483648
    %v234 = vmul.f32 %v233, 1.442695
    %v235 = vpow.pop %v234
    %v236 = vadd.f32 %v235, 1.0
    %v237 = vrcp.pop %v236
    %v238 = vmul.f32 %v236, %v237
    %v239 = vsub.f32 1.0, %v238
    %v240 = vmul.f32 %v237, %v239
    %v241 = vadd.f32 %v237, %v240
    %vm242 = vweird.f32 %v236
    %vm243 = vweird.f32 %v237
    %vm244 = vmor %vm242, %vm243
    %v245 = vsel %vm244, %v237, %v241
    %v246 = vand.u32 2147483647, %v236
    %vm247 = vcmp.eq.f32.partialorder %v246, 8.507059e+37
    %v248 = vand.u32 %v236, 2147483648
    %v249 = vor.u32 1.1754944e-38, %v248
    %v250 = vsel %vm247, %v249, %v245
    %v251 = vmul.f32 1.0, %v250
    %v252 = vmul.f32 %v251, %v82
    %v253 = vpack.c.bf16 %v252, %v252
    %v254 = vld [vmem:[#allocation8] sm:$0xf]
    %v255 = vld [vmem:[#allocation8 + $0x4] sm:$0xf]
    %v256 = vld [vmem:[#allocation8 + $0x8] sm:$0xf]
    %v257 = vld [vmem:[#allocation8 + $0xc] sm:$0xf]
    %v258 = vld [vmem:[#allocation8 + $0x10] sm:$0xf]
    %v259 = vld [vmem:[#allocation8 + $0x14] sm:$0xf]
    %v260 = vld [vmem:[#allocation8 + $0x18] sm:$0xf]
    %v261 = vld [vmem:[#allocation8 + $0x1c] sm:$0xf]
    %v262 = vld [vmem:[#allocation8 + $0x20] sm:$0xf]
    %v263 = vld [vmem:[#allocation8 + $0x24] sm:$0xf]
    %v264 = vld [vmem:[#allocation8 + $0x28] sm:$0xf]
    %v265 = vld [vmem:[#allocation8 + $0x2c] sm:$0xf]
    %v266 = vld [vmem:[#allocation8 + $0x30] sm:$0xf]
    %v267 = vld [vmem:[#allocation8 + $0x34] sm:$0xf]
    %v268 = vld [vmem:[#allocation8 + $0x38] sm:$0xf]
    %v269 = vld [vmem:[#allocation8 + $0x3c] sm:$0xf]
    %v286 = vunpack.c.l.b16 %v254
    %v287 = vunpack.c.l.b16 %v255
    %v288 = vunpack.c.l.b16 %v256
    %v289 = vunpack.c.l.b16 %v257
    %v290 = vunpack.c.l.b16 %v258
    %v291 = vunpack.c.l.b16 %v259
    %v292 = vunpack.c.l.b16 %v260
    %v293 = vunpack.c.l.b16 %v261
    %v294 = vunpack.c.l.b16 %v262
    %v295 = vunpack.c.l.b16 %v263
    %v296 = vunpack.c.l.b16 %v264
    %v297 = vunpack.c.l.b16 %v265
    %v298 = vunpack.c.l.b16 %v266
    %v299 = vunpack.c.l.b16 %v267
    %v300 = vunpack.c.l.b16 %v268
    %v301 = vunpack.c.l.b16 %v269
    %v302 = vpack.c.b16 %v287, %v286
    %v303 = vpack.c.b16 %v289, %v288
    %v304 = vpack.c.b16 %v291, %v290
    %v305 = vpack.c.b16 %v293, %v292
    %v306 = vpack.c.b16 %v295, %v294
    %v307 = vpack.c.b16 %v297, %v296
    %v308 = vpack.c.b16 %v299, %v298
    %v309 = vpack.c.b16 %v301, %v300
    %318 = vmatpush.bf16.msra.mxu0 %v309
    %319 = vmatpush.bf16.msra.mxu0 %v308
    %320 = vmatpush.bf16.msra.mxu0 %v307
    %321 = vmatpush.bf16.msra.mxu0 %v306
    %322 = vmatpush.bf16.msra.mxu0 %v305
    %323 = vmatpush.bf16.msra.mxu0 %v304
    %324 = vmatpush.bf16.msra.mxu0 %v303
    %325 = vmatpush.bf16.msra.mxu0 %v302
    %326 = vmatmul.bf16.gmra.mxu0 %v253
    %v327 = vpop.f32.mrf.mxu0
    %v328 = vadd.f32 0.0, %v327
    %v329 = vpop.f32.mrf.mxu0
    %330 = vdwg.mxu0
    %v331 = vadd.f32 %v211, %v328
    %v332 = vtanh.pop %v331
    %v333 = vmul.f32 %v232, %v82
    %v334 = vsub.f32 1.0, %v232
    %v335 = vmul.f32 %v334, %v332
    %v336 = vadd.f32 %v333, %v335
    %337 = vst [vmem:[#allocation10] sm:$0xff] %v336
    // Predicated region
    $region38: #{tpu_custom_call.1} parent=1 // pred_check
      _
    $region39: #{tpu_custom_call.1} parent=1 // pred_check_branch
      %339 = sbr.rel (0) target = $region41
    $region40: #{tpu_custom_call.1} parent=1 // pred_region
      %341 = vsyncadd [#allocation4], 0
      %s343 = sshll.u32 [#allocation10], 4
      %s344 = int_to_ptr.vmem [resolvable:$true] %s343
      %s345 = sshll.u32 %s5, 4
      %s346 = int_to_ptr.hbm [resolvable:$true] %s345
      %348 = dma.vmem_to_hbm [thread:$0]  %s344, 128, %s346, [#allocation4]
    $region41: #{tpu_custom_call.1} parent=1 // pred_fallthru
      _
    // Predicated region
    $region42: #{tpu_custom_call.1} parent=1 // pred_check
      _
    $region43: #{tpu_custom_call.1} parent=1 // pred_check_branch
      %350 = sbr.rel (0) target = $region45
    $region44: #{tpu_custom_call.1} parent=1 // pred_region
      %352 = dma.done [#allocation4], 128
    $region45: #{tpu_custom_call.1} parent=1 // pred_fallthru
      _
    %353 = vsyncpa [#allocation3], 1
    %354 = vsyncpa [#allocation6], 1
    %355 = vsyncpa [#allocation9], 1
    %356 = vsyncpa [#allocation4], 1

</llo_original>
